<compile_context>
chip_gen: v7x
topology: tpu7x:2x2x1
jax: 0.10.0
libtpu: 0.0.40
codegen_flags: <defaults>
</compile_context>

<pallas_src>
import functools

import jax
import jax.numpy as jnp
from jax.experimental import pallas as pl
from jax.experimental.pallas import tpu as pltpu


def _round_up(x, m):
    return (x + m - 1) // m * m


# ----------------------------- Pallas kernel --------------------------------

def _lora_moe_kernel(x_ref, a_t_ref, beff_ref, o_ref, *, scaling: float):
    """One (batch, seq-tile) block.

    x_ref    : (1, tm, d_in)        token activations
    a_t_ref  : (d_in, r)            lora_A.weight^T (grid-invariant)
    beff_ref : (1, r, d_out_pad)    gate-folded effective B weight for batch b
    o_ref    : (1, tm, d_out_pad)   gated LoRA output * scaling
    """
    shared = jnp.dot(x_ref[0], a_t_ref[...],
                     preferred_element_type=jnp.float32)          # (tm, r)
    out = jnp.dot(shared.astype(beff_ref.dtype), beff_ref[0],
                  preferred_element_type=jnp.float32)             # (tm, d_out_pad)
    o_ref[0] = (out * scaling).astype(o_ref.dtype)


def lora_moe_matmul(x, a_t, b_eff, *, scaling, tm=256, vmem_limit_bytes=None):
    """x: [B, S, d_in], a_t: [d_in, r], b_eff: [B, r, d_out] -> [B, S, d_out]."""
    B, S, d_in = x.shape
    r = a_t.shape[1]
    d_out = b_eff.shape[-1]

    # Lane-dense output stores: pad d_out up to a multiple of 128.  Padding is
    # applied to the tiny [B, r, d_out] weight only.
    d_out_pad = _round_up(d_out, 128)
    if d_out_pad != d_out:
        b_eff = jnp.pad(b_eff, ((0, 0), (0, 0), (0, d_out_pad - d_out)))

    # Token tiling: large tiles amortise per-step pipeline overhead; pad the
    # sequence with zero tokens instead of asserting divisibility.
    tm = max(8, min(tm, _round_up(S, 8)))
    tm = _round_up(tm, 8)
    S_pad = _round_up(S, tm)
    if S_pad != S:
        x = jnp.pad(x, ((0, 0), (0, S_pad - S), (0, 0)))

    kernel = functools.partial(_lora_moe_kernel, scaling=scaling)
    grid = (B, S_pad // tm)

    itemsize = jnp.dtype(x.dtype).itemsize
    cost = pl.CostEstimate(
        flops=2 * B * S_pad * r * (d_in + d_out_pad),
        transcendentals=0,
        bytes_accessed=(B * S_pad * (d_in + d_out_pad)
                        + d_in * r + B * r * d_out_pad) * itemsize)

    out = pl.pallas_call(
        kernel,
        out_shape=jax.ShapeDtypeStruct((B, S_pad, d_out_pad), x.dtype),
        grid_spec=pltpu.PrefetchScalarGridSpec(
            num_scalar_prefetch=0,
            grid=grid,
            in_specs=[
                pl.BlockSpec((1, tm, d_in), lambda b, s: (b, s, 0)),
                # a_t / b_eff are tiny (r is small), so double-buffering them
                # costs negligible VMEM; for very large d_in/d_out consider
                # pipeline_mode=pl.Buffered(1) on the grid-invariant a_t.
                pl.BlockSpec((d_in, r), lambda b, s: (0, 0)),
                pl.BlockSpec((1, r, d_out_pad), lambda b, s: (b, 0, 0)),
            ],
            out_specs=pl.BlockSpec((1, tm, d_out_pad), lambda b, s: (b, s, 0)),
        ),
        compiler_params=pltpu.CompilerParams(
            dimension_semantics=("parallel", "parallel"),
            vmem_limit_bytes=vmem_limit_bytes),
        cost_estimate=cost,
    )(x, a_t, b_eff)

    return out[:, :S, :d_out]


# ------------------------------ JAX glue -------------------------------------

def top_k_gating_eval(routing_input, w_route, lora_nums, topk):
    """Eval-mode noisy_top_k_gating (no noise): sparse softmax over top-k logits."""
    logits = routing_input @ w_route.T                              # [B, L]
    k = min(topk + 1, lora_nums)
    top_logits, top_indices = jax.lax.top_k(logits, k)
    top_k_logits = top_logits[:, :topk]
    top_k_indices = top_indices[:, :topk]
    top_k_gates = jax.nn.softmax(
        top_k_logits.astype(jnp.float32), axis=-1).astype(routing_input.dtype)
    B = logits.shape[0]
    gates = jnp.zeros_like(logits)
    gates = gates.at[jnp.arange(B)[:, None], top_k_indices].set(top_k_gates)
    return gates


def lora_adapter_forward(x, eof_index, params, *,
                         r=8, lora_alpha=16, lora_nums=2, topk=2,
                         tm=256, compute_dtype=None, vmem_limit_bytes=None):
    """Eval-mode LoRAAdapter.forward(x, eof_index=eof_index).

    compute_dtype: set to jnp.bfloat16 on v6e/v7x to halve HBM traffic (the
    kernel still accumulates in f32); leave None to compute in x.dtype.
    """
    B, S, d_in = x.shape
    topk = min(topk, lora_nums)
    scaling = lora_alpha / r

    # routing_input = x[arange(B), eof_index]
    routing_input = x[jnp.arange(B), eof_index]                     # [B, d_in]
    gates = top_k_gating_eval(routing_input, params["w_route"],
                              lora_nums, topk)                      # [B, L]

    # Fold per-batch gates into one effective B weight per batch:
    #   B_eff[b] = sum_i gates[b, i] * lora_Bs[i].weight^T  -> [B, r, d_out]
    b_eff = jnp.einsum("bl,lor->bro",
                       gates.astype(jnp.float32),
                       params["w_b"].astype(jnp.float32))
    a_t = params["w_a"].T                                           # [d_in, r]

    dt = compute_dtype if compute_dtype is not None else x.dtype
    out = lora_moe_matmul(x.astype(dt), a_t.astype(dt), b_eff.astype(dt),
                          scaling=scaling, tm=tm,
                          vmem_limit_bytes=vmem_limit_bytes)
    return out.astype(x.dtype)


def lora_adapter_reference(x, eof_index, params, *,
                           r=8, lora_alpha=16, lora_nums=2, topk=2):
    """Pure-JAX reference matching the PyTorch eval-mode forward."""
    B, S, _ = x.shape
    topk = min(topk, lora_nums)
    scaling = lora_alpha / r
    routing_input = x[jnp.arange(B), eof_index]
    gates = top_k_gating_eval(routing_input, params["w_route"], lora_nums, topk)
    hp = jax.lax.Precision.HIGHEST
    shared = jnp.einsum("bsi,ri->bsr", x, params["w_a"], precision=hp)
    out = jnp.zeros((B, S, params["w_b"].shape[1]), x.dtype)
    for i in range(lora_nums):
        expert = jnp.einsum("bsr,or->bso", shared, params["w_b"][i], precision=hp)
        out = out + expert * gates[:, i][:, None, None]
    return out * scaling


# ------------------------------- main ----------------------------------------

if __name__ == "__main__":
    B, S = 2, 8
    in_features, out_features = 32, 32
    r, lora_alpha, lora_nums, topk = 8, 16, 2, 2

    key = jax.random.PRNGKey(0)
    kx, ka, kb, kr, ke = jax.random.split(key, 5)

    x = jax.random.normal(kx, (B, S, in_features), dtype=jnp.float32)
    eof_index = jax.random.randint(ke, (B,), 0, S)

    # Deterministic synthetic weights (note: the PyTorch init zeros lora_B /
    # w_noise, which would give an all-zero output; use small random weights
    # instead so the kernel computes something meaningful).
    params = {
        "w_a": jax.random.normal(ka, (r, in_features), jnp.float32) * 0.1,
        "w_b": jax.random.normal(kb, (lora_nums, out_features, r), jnp.float32) * 0.1,
        "w_route": jax.random.normal(kr, (lora_nums, in_features), jnp.float32) * 0.1,
        # w_noise omitted: eval-mode path does not use it.
    }

    out = lora_adapter_forward(x, eof_index, params,
                               r=r, lora_alpha=lora_alpha,
                               lora_nums=lora_nums, topk=topk, tm=256)
    out = jax.block_until_ready(out)

    ref = lora_adapter_reference(x, eof_index, params,
                                 r=r, lora_alpha=lora_alpha,
                                 lora_nums=lora_nums, topk=topk)
    assert out.shape == (B, S, out_features)
    assert jnp.allclose(out, ref, atol=1e-4, rtol=1e-4), (
        float(jnp.max(jnp.abs(out - ref))))
    print("KERNEL_OK")
</pallas_src>

<mosaic_0001>
module attributes {stable_mosaic.version = 11 : i64} {
  func.func @_lora_moe_kernel(%arg0: i32, %arg1: i32, %arg2: memref<1x8x32xf32, #tpu.memory_space<vmem>>, %arg3: memref<32x8xf32, #tpu.memory_space<vmem>>, %arg4: memref<1x8x128xf32, #tpu.memory_space<vmem>>, %arg5: memref<1x8x128xf32, #tpu.memory_space<vmem>>) attributes {dimension_semantics = [#tpu.dimension_semantics<parallel>, #tpu.dimension_semantics<parallel>], iteration_bounds = array<i64: 2, 1>, scalar_prefetch = 0 : i64, scratch_operands = 0 : i64, tpu.core_type = #tpu.core_type<tc>, window_params = [{transform_indices = @transform_0, window_bounds = array<i64: 1, 8, 32>}, {pipeline_mode = #tpu.pipeline_mode<synchronous>, transform_indices = @transform_1, window_bounds = array<i64: 32, 8>}, {transform_indices = @transform_2, window_bounds = array<i64: 1, 8, 128>}, {transform_indices = @transform_3, window_bounds = array<i64: 1, 8, 128>}]} {
    %c0 = arith.constant 0 : index
    %c0_0 = arith.constant 0 : index
    %c0_1 = arith.constant 0 : index
    %0 = vector.load %arg2[%c0, %c0_0, %c0_1] : memref<1x8x32xf32, #tpu.memory_space<vmem>>, vector<1x8x32xf32>
    %1 = vector.shape_cast %0 : vector<1x8x32xf32> to vector<8x32xf32>
    %c0_2 = arith.constant 0 : index
    %c0_3 = arith.constant 0 : index
    %2 = vector.load %arg3[%c0_2, %c0_3] : memref<32x8xf32, #tpu.memory_space<vmem>>, vector<32x8xf32>
    %cst = arith.constant dense<0.000000e+00> : vector<8x8xf32>
    %3 = tpu.matmul %1, %2, %cst {dimension_numbers = #tpu.dot_dimension_numbers<[1], [0], [0], [1], [0, 0, 1, 1], [], []>} : vector<8x32xf32>, vector<32x8xf32>, vector<8x8xf32> -> vector<8x8xf32>
    %c0_4 = arith.constant 0 : index
    %c0_5 = arith.constant 0 : index
    %c0_6 = arith.constant 0 : index
    %4 = vector.load %arg4[%c0_4, %c0_5, %c0_6] : memref<1x8x128xf32, #tpu.memory_space<vmem>>, vector<1x8x128xf32>
    %5 = vector.shape_cast %4 : vector<1x8x128xf32> to vector<8x128xf32>
    %cst_7 = arith.constant dense<0.000000e+00> : vector<8x128xf32>
    %6 = tpu.matmul %3, %5, %cst_7 {dimension_numbers = #tpu.dot_dimension_numbers<[1], [0], [0], [1], [0, 0, 1, 1], [], []>} : vector<8x8xf32>, vector<8x128xf32>, vector<8x128xf32> -> vector<8x128xf32>
    %cst_8 = arith.constant 2.000000e+00 : f32
    %7 = vector.broadcast %cst_8 : f32 to vector<8x128xf32>
    %8 = arith.mulf %6, %7 : vector<8x128xf32>
    %c0_9 = arith.constant 0 : index
    %c0_10 = arith.constant 0 : index
    %c0_11 = arith.constant 0 : index
    %9 = vector.load %arg5[%c0_9, %c0_10, %c0_11] : memref<1x8x128xf32, #tpu.memory_space<vmem>>, vector<1x8x128xf32>
    %10 = vector.shape_cast %9 : vector<1x8x128xf32> to vector<8x128xf32>
    %11 = vector.shape_cast %8 : vector<8x128xf32> to vector<1x8x128xf32>
    tpu.vector_store %arg5[%c0_9, %c0_10, %c0_11], %11 {strides = array<i32>} : memref<1x8x128xf32, #tpu.memory_space<vmem>>, vector<1x8x128xf32>,
    return
  }
  func.func @transform_0(%arg0: i32, %arg1: i32) -> (i32, i32, i32) {
    %c0_i32 = arith.constant 0 : i32
    %c0_i32_0 = arith.constant 0 : i32
    return %arg0, %arg1, %c0_i32 : i32, i32, i32
  }
  func.func @transform_1(%arg0: i32, %arg1: i32) -> (i32, i32) {
    %c0_i32 = arith.constant 0 : i32
    %c0_i32_0 = arith.constant 0 : i32
    %c0_i32_1 = arith.constant 0 : i32
    return %c0_i32, %c0_i32_0 : i32, i32
  }
  func.func @transform_2(%arg0: i32, %arg1: i32) -> (i32, i32, i32) {
    %c0_i32 = arith.constant 0 : i32
    %c0_i32_0 = arith.constant 0 : i32
    %c0_i32_1 = arith.constant 0 : i32
    return %arg0, %c0_i32, %c0_i32_0 : i32, i32, i32
  }
  func.func @transform_3(%arg0: i32, %arg1: i32) -> (i32, i32, i32) {
    %c0_i32 = arith.constant 0 : i32
    %c0_i32_0 = arith.constant 0 : i32
    return %arg0, %arg1, %c0_i32 : i32, i32, i32
  }
}

</mosaic_0001>

<llo_original>
// kernel: tpu_custom_call.1
$region0: #{tpu_custom_call.1}
  #allocation0 [shape = 'u32[]', space=smem, size = 0x4, offset = 0x4, fixed_abs, tag = 'smem constant byte address 0x4 - core index']
  #allocation1 [shape = 'u32[144,128]{1,0:T(1,128)}', space=vmem, size = 0x12000, scoped, tag = 'internal scratch']
  %s0 = inlined_call_operand.vmem [shape: f32[2,8,32], index: 0, kind: input, shape index: {}]
  %s1 = inlined_call_operand.vmem [shape: f32[32,8], index: 1, kind: input, shape index: {}]
  %s2 = inlined_call_operand.vmem [shape: f32[2,8,128], index: 2, kind: input, shape index: {}]
  %s3 = inlined_call_operand.hbm [shape: f32[2,8,128], index: 3, kind: output, shape index: {}]
  %s4 = sld [smem:[#allocation0]]
  $region45: #{tpu_custom_call.1} parent=0
    _
  %s6 = ssub.s32 1, %s4
  %s7 = scalar_select 0, %s6, %s4
  $region1: #{tpu_custom_call.1} parent=0
    #allocation2 [shape = 'u8[8192]{0}', space=vmem, size = 0x2000, scoped, tag = 'output window, operand 0']
    #allocation3 [shape = 's32[2]{0}', space=sflag, size = 0x8, scoped, tag = 'scoped memory for tpu_custom_call.1']
    %8 = vsyncpa [#allocation3], 0
    %s9 = scalar_lea.sflag [#allocation3], 1
    %10 = vsyncpa %s9, 0
    loop: start=0, step=1, limit=4
    $region2: #{tpu_custom_call.1} parent=1 // loop_pre_header
      _
    $region3: #{tpu_custom_call.1} parent=1 // loop_header
      %s12 = sphi 0, %s16
      %p13 = scmp.ge.s32.totalorder %s12, 4
      %s19 = sphi 0, %s31
      %s20 = sphi 0, %s27
      %s21 = sphi 0, %s19
      %s22 = sphi 0, %s20
      %s23 = sphi 0, %s21
      %s24 = sphi 0, %s22
      %s36 = sphi 0, %s38
      %s39 = sphi 0, %s36
      %s40 = sphi 0, %s39
      %s56 = sphi 0, %s40
      %s60 = sphi 0, %s60
      %s62 = sphi 0, %s60
      %s63 = sphi 0, %s62
      %s77 = sphi 0, %s63
      %s83 = sphi 0, %s85
      %s86 = sphi 0, %s83
      %s87 = sphi 0, %s86
      %s103 = sphi 0, %s87
      %s111 = sphi 0, %s113
      %s114 = sphi 0, %s111
      %s115 = sphi 0, %s114
      %s131 = sphi 0, %s115
    $region4: #{tpu_custom_call.1} parent=1 // loop_header_branch
      %15 = sbr.rel (%p13) target = $region8
    $region5: #{tpu_custom_call.1} parent=1 // loop_body
      %s17 = ssub.s32 %s12, 1
      %s18 = ssub.s32 %s12, 2
      %s25 = sadd.s32 1, %s20
      %p26 = scmp.ge.s32.totalorder %s25, 1
      %s27 = scalar_select %p26, 0, %s25
      %s28 = sadd.s32 1, %s19
      %s29 = scalar_select %p26, %s28, %s19
      %p30 = scmp.ge.s32.totalorder %s29, 2
      %s31 = scalar_select %p30, 0, %s29
      %s32 = ssub.s32 %s19, %s31
      %s33 = ssub.s32 %s20, %s27
      %s34 = sor.u32 %s32, %s33
      %p35 = scmp.eq.s32.totalorder %s34, 0
      %s37 = sadd.s32 %s36, 1
      %s38 = scalar_select %p35, %s36, %s37
      %p41 = pneg %p35
      %p42 = scmp.eq.s32.totalorder %s12, 1
      %p43 = por %p41, %p42
      %p44 = scmp.ne.s32.totalorder %s36, %s39
      %p45 = scmp.eq.s32.totalorder %s12, 0
      %p46 = por %p44, %p45
      %p47 = scmp.ne.s32.totalorder %s36, %s39
      %p48 = scmp.eq.s32.totalorder %s17, 1
      %p49 = por %p47, %p48
      %p50 = scmp.ne.s32.totalorder %s39, %s40
      %p51 = scmp.eq.s32.totalorder %s17, 0
      %p52 = por %p50, %p51
      %p53 = scmp.ne.s32.totalorder %s39, %s40
      %p54 = scmp.eq.s32.totalorder %s18, 1
      %p55 = por %p53, %p54
      %p57 = scmp.ne.s32.totalorder %s40, %s56
      %p58 = scmp.eq.s32.totalorder %s18, 0
      %p59 = por %p57, %p58
      %s61 = sadd.s32 %s60, 1
      %p64 = scmp.eq.s32.totalorder %s12, 1
      %p65 = scmp.ne.s32.totalorder %s60, %s62
      %p66 = scmp.eq.s32.totalorder %s12, 0
      %p67 = por %p65, %p66
      %p68 = scmp.ne.s32.totalorder %s60, %s62
      %p69 = scmp.eq.s32.totalorder %s17, 1
      %p70 = por %p68, %p69
      %p71 = scmp.ne.s32.totalorder %s62, %s63
      %p72 = scmp.eq.s32.totalorder %s17, 0
      %p73 = por %p71, %p72
      %p74 = scmp.ne.s32.totalorder %s62, %s63
      %p75 = scmp.eq.s32.totalorder %s18, 1
      %p76 = por %p74, %p75
      %p78 = scmp.ne.s32.totalorder %s63, %s77
      %p79 = scmp.eq.s32.totalorder %s18, 0
      %p80 = por %p78, %p79
      %s81 = ssub.s32 %s19, %s31
      %p82 = scmp.eq.s32.totalorder %s81, 0
      %s84 = sadd.s32 %s83, 1
      %s85 = scalar_select %p82, %s83, %s84
      %p88 = pneg %p82
      %p89 = scmp.eq.s32.totalorder %s12, 1
      %p90 = por %p88, %p89
      %p91 = scmp.ne.s32.totalorder %s83, %s86
      %p92 = scmp.eq.s32.totalorder %s12, 0
      %p93 = por %p91, %p92
      %p94 = scmp.ne.s32.totalorder %s83, %s86
      %p95 = scmp.eq.s32.totalorder %s17, 1
      %p96 = por %p94, %p95
      %p97 = scmp.ne.s32.totalorder %s86, %s87
      %p98 = scmp.eq.s32.totalorder %s17, 0
      %p99 = por %p97, %p98
      %p100 = scmp.ne.s32.totalorder %s86, %s87
      %p101 = scmp.eq.s32.totalorder %s18, 1
      %p102 = por %p100, %p101
      %p104 = scmp.ne.s32.totalorder %s87, %s103
      %p105 = scmp.eq.s32.totalorder %s18, 0
      %p106 = por %p104, %p105
      %s107 = ssub.s32 %s19, %s31
      %s108 = ssub.s32 %s20, %s27
      %s109 = sor.u32 %s107, %s108
      %p110 = scmp.eq.s32.totalorder %s109, 0
      %s112 = sadd.s32 %s111, 1
      %s113 = scalar_select %p110, %s111, %s112
      %p116 = pneg %p110
      %p117 = scmp.eq.s32.totalorder %s12, 1
      %p118 = por %p116, %p117
      %p119 = scmp.ne.s32.totalorder %s111, %s114
      %p120 = scmp.eq.s32.totalorder %s12, 0
      %p121 = por %p119, %p120
      %p122 = scmp.ne.s32.totalorder %s111, %s114
      %p123 = scmp.eq.s32.totalorder %s17, 1
      %p124 = por %p122, %p123
      %p125 = scmp.ne.s32.totalorder %s114, %s115
      %p126 = scmp.eq.s32.totalorder %s17, 0
      %p127 = por %p125, %p126
      %p128 = scmp.ne.s32.totalorder %s114, %s115
      %p129 = scmp.eq.s32.totalorder %s18, 1
      %p130 = por %p128, %p129
      %p132 = scmp.ne.s32.totalorder %s115, %s131
      %p133 = scmp.eq.s32.totalorder %s18, 0
      %p134 = por %p132, %p133
      %p135 = scmp.le.s32.totalorder 1, %s12
      %p136 = scmp.lt.s32.totalorder %s12, 3
      %p137 = pnand %p135, %p136
      %p138 = pneg %p137
      // Predicated region
      $region9: #{tpu_custom_call.1} parent=5 // pred_check
        _
      $region10: #{tpu_custom_call.1} parent=5 // pred_check_branch
        %140 = sbr.rel (%p137) target = $region12
      $region11: #{tpu_custom_call.1} parent=5 // pred_region
        %s141 = ssub.s32 %s12, 1
        // Predicated region
        $region13: #{tpu_custom_call.1} parent=11 // pred_check
          %p142 = pneg %p73
        $region14: #{tpu_custom_call.1} parent=11 // pred_check_branch
          %144 = sbr.rel (%p142) target = $region16
        $region15: #{tpu_custom_call.1} parent=11 // pred_region
          _
        $region16: #{tpu_custom_call.1} parent=11 // pred_fallthru
          _
      $region12: #{tpu_custom_call.1} parent=5 // pred_fallthru
        _
      %p145 = scmp.lt.s32.totalorder %s12, 2
      // Predicated region
      $region17: #{tpu_custom_call.1} parent=5 // pred_check
        %p146 = pneg %p145
      $region18: #{tpu_custom_call.1} parent=5 // pred_check_branch
        %148 = sbr.rel (%p146) target = $region20
      $region19: #{tpu_custom_call.1} parent=5 // pred_region
        // Predicated region
        $region21: #{tpu_custom_call.1} parent=19 // pred_check
          %p149 = pneg %p46
        $region22: #{tpu_custom_call.1} parent=19 // pred_check_branch
          %151 = sbr.rel (%p149) target = $region24
        $region23: #{tpu_custom_call.1} parent=19 // pred_region
          %p152 = scmp.lt.s32.totalorder %s19, 1
          %s153 = scalar_select %p152, %s19, 1
          %p154 = scmp.lt.s32.totalorder %s20, 0
          %s155 = scalar_select %p154, %s20, 0
          %s156 = sadd.s32 %s155, %s153
          %s157 = smul.addr %s156, 8
          %s158 = scalar_lea.vmem %s0, %s157
        $region24: #{tpu_custom_call.1} parent=19 // pred_fallthru
          _
        // Predicated region
        $region25: #{tpu_custom_call.1} parent=19 // pred_check
          %p159 = pneg %p93
        $region26: #{tpu_custom_call.1} parent=19 // pred_check_branch
          %161 = sbr.rel (%p159) target = $region28
        $region27: #{tpu_custom_call.1} parent=19 // pred_region
          %p162 = scmp.lt.s32.totalorder %s19, 1
          %s163 = scalar_select %p162, %s19, 1
          %s164 = smul.addr %s163, 8
          %s165 = scalar_lea.vmem %s2, %s164
        $region28: #{tpu_custom_call.1} parent=19 // pred_fallthru
          _
      $region20: #{tpu_custom_call.1} parent=5 // pred_fallthru
        _
      %p166 = scmp.le.s32.totalorder 1, %s12
      %p167 = scmp.lt.s32.totalorder %s12, 3
      %p168 = pnand %p166, %p167
      %p169 = pneg %p168
      // Predicated region
      $region29: #{tpu_custom_call.1} parent=5 // pred_check
        _
      $region30: #{tpu_custom_call.1} parent=5 // pred_check_branch
        %171 = sbr.rel (%p168) target = $region32
      $region31: #{tpu_custom_call.1} parent=5 // pred_region
        %s172 = ssub.s32 %s12, 1
        %p173 = scmp.lt.s32.totalorder %s21, 1
        %s174 = scalar_select %p173, %s21, 1
        %p175 = scmp.lt.s32.totalorder %s22, 0
        %s176 = scalar_select %p175, %s22, 0
        %s177 = sadd.s32 %s176, %s174
        %s178 = smul.addr %s177, 8
        %s179 = scalar_lea.vmem %s0, %s178
        %p180 = pneg %p52
        %p181 = pneg %p49
        %p182 = pneg %p73
        %p183 = pneg %p70
        %p184 = scmp.lt.s32.totalorder %s21, 1
        %s185 = scalar_select %p184, %s21, 1
        %s186 = smul.addr %s185, 8
        %s187 = scalar_lea.vmem %s2, %s186
        %p188 = pneg %p99
        %p189 = pneg %p96
        %p190 = pneg %p127
        %p191 = pneg %p124
        %s192 = sand.u32 %s114, 1
        %s193 = scalar_lea.sflag [#allocation3], %s192
        %s194 = sand.u32 %s114, 1
        %s195 = smul.addr %s194, 8
        %s196 = scalar_lea.vmem [#allocation2], %s195
        %p197 = scmp.lt.s32.totalorder %s21, 1
        %s198 = scalar_select %p197, %s21, 1
        %p199 = scmp.lt.s32.totalorder %s22, 0
        %s200 = scalar_select %p199, %s22, 0
        %s201 = sadd.s32 %s200, %s198
        %s202 = smul.addr %s201, 8
        %s203 = scalar_lea.vmem %s0, %s202
        %p204 = scmp.lt.s32.totalorder %s21, 1
        %s205 = scalar_select %p204, %s21, 1
        %s206 = smul.addr %s205, 8
        %s207 = scalar_lea.vmem %s2, %s206
        %v208 = vld [vmem:[%s203] sm:$0xff]
        %v209 = vld [vmem:[%s1] sm:$0xff]
        %v210 = vld [vmem:[%s1 + $0x8] sm:$0xff]
        %v211 = vld [vmem:[%s1 + $0x10] sm:$0xff]
        %v212 = vld [vmem:[%s1 + $0x18] sm:$0xff]
        %vm213 = vcmask 261120
        %v215 = vsel %vm213, %v208, 0
        %217 = vmatprep.subr.mxu0 0.0
        %218 = vmatpush1.msra.mxu0 %v209
        %219 = vmatprep.subr.mxu0 0.0
        %220 = vmatpush1.msra.mxu0 %v210
        %221 = vmatprep.subr.mxu0 0.0
        %222 = vmatpush1.msra.mxu0 %v211
        %223 = vmatprep.subr.mxu0 0.0
        %224 = vmatpush1.msra.mxu0 %v212
        %225 = vmatprep.subr.mxu0 0.0
        %226 = vmatpush1.msra.mxu0 0.0
        %227 = vmatprep.subr.mxu0 0.0
        %228 = vmatpush1.msra.mxu0 0.0
        %229 = vmatprep.subr.mxu0 0.0
        %230 = vmatpush1.msra.mxu0 0.0
        %231 = vmatprep.subr.mxu0 0.0
        %232 = vmatpush1.msra.mxu0 0.0
        %233 = vmatprep.subr.mxu0 0.0
        %234 = vmatpush1.msra.mxu0 0.0
        %235 = vmatprep.subr.mxu0 0.0
        %236 = vmatpush1.msra.mxu0 0.0
        %237 = vmatprep.subr.mxu0 0.0
        %238 = vmatpush1.msra.mxu0 0.0
        %239 = vmatprep.subr.mxu0 0.0
        %240 = vmatpush1.msra.mxu0 0.0
        %241 = vmatprep.subr.mxu0 0.0
        %242 = vmatpush1.msra.mxu0 0.0
        %243 = vmatprep.subr.mxu0 0.0
        %244 = vmatpush1.msra.mxu0 0.0
        %245 = vmatprep.subr.mxu0 0.0
        %246 = vmatpush1.msra.mxu0 0.0
        %247 = vmatprep.subr.mxu0 0.0
        %248 = vmatpush1.msra.mxu0 0.0
        %249 = vmatprep.subr.mxu0 0.0
        %250 = vmatpush1.msra.mxu0 0.0
        %251 = vmatprep.subr.mxu0 0.0
        %252 = vmatpush1.msra.mxu0 0.0
        %253 = vmatprep.subr.mxu0 0.0
        %254 = vmatpush1.msra.mxu0 0.0
        %255 = vmatprep.subr.mxu0 0.0
        %256 = vmatpush1.msra.mxu0 0.0
        %257 = vmatprep.subr.mxu0 0.0
        %258 = vmatpush1.msra.mxu0 0.0
        %259 = vmatprep.subr.mxu0 0.0
        %260 = vmatpush1.msra.mxu0 0.0
        %261 = vmatprep.subr.mxu0 0.0
        %262 = vmatpush1.msra.mxu0 0.0
        %263 = vmatprep.subr.mxu0 0.0
        %264 = vmatpush1.msra.mxu0 0.0
        %265 = vmatprep.subr.mxu0 0.0
        %266 = vmatpush1.msra.mxu0 0.0
        %267 = vmatprep.subr.mxu0 0.0
        %268 = vmatpush1.msra.mxu0 0.0
        %269 = vmatprep.subr.mxu0 0.0
        %270 = vmatpush1.msra.mxu0 0.0
        %271 = vmatprep.subr.mxu0 0.0
        %272 = vmatpush1.msra.mxu0 0.0
        %273 = vmatprep.subr.mxu0 0.0
        %274 = vmatpush1.msra.mxu0 0.0
        %275 = vmatprep.subr.mxu0 0.0
        %276 = vmatpush1.msra.mxu0 0.0
        %277 = vmatprep.subr.mxu0 0.0
        %278 = vmatpush1.msra.mxu0 0.0
        %279 = vmatprep.subr.mxu0 0.0
        %280 = vmatpush1.msra.mxu0 0.0
        %281 = vmatprep.mubr.f32.mxu0 0.0
        %282 = vmatmul.mubr.f32.gmra.mrb[0].mxu0 %v215
        %v283 = vpop.f32.mrb[0].mxu0
        %v284 = vadd.f32 0.0, %v283
        %v285 = vpop.f32.mrb[0].mxu0
        %286 = vdwg.mxu0
        %v287 = vld [vmem:[%s207] sm:$0xff]
        %vm288 = vcmask 64512
        %v290 = vsel %vm288, %v284, 0
        %292 = vmatprep.subr.mxu0 0.0
        %293 = vmatpush1.msra.mxu0 %v287
        %294 = vmatprep.subr.mxu0 0.0
        %295 = vmatpush1.msra.mxu0 0.0
        %296 = vmatprep.subr.mxu0 0.0
        %297 = vmatpush1.msra.mxu0 0.0
        %298 = vmatprep.subr.mxu0 0.0
        %299 = vmatpush1.msra.mxu0 0.0
        %300 = vmatprep.subr.mxu0 0.0
        %301 = vmatpush1.msra.mxu0 0.0
        %302 = vmatprep.subr.mxu0 0.0
        %303 = vmatpush1.msra.mxu0 0.0
        %304 = vmatprep.subr.mxu0 0.0
        %305 = vmatpush1.msra.mxu0 0.0
        %306 = vmatprep.subr.mxu0 0.0
        %307 = vmatpush1.msra.mxu0 0.0
        %308 = vmatprep.subr.mxu0 0.0
        %309 = vmatpush1.msra.mxu0 0.0
        %310 = vmatprep.subr.mxu0 0.0
        %311 = vmatpush1.msra.mxu0 0.0
        %312 = vmatprep.subr.mxu0 0.0
        %313 = vmatpush1.msra.mxu0 0.0
        %314 = vmatprep.subr.mxu0 0.0
        %315 = vmatpush1.msra.mxu0 0.0
        %316 = vmatprep.subr.mxu0 0.0
        %317 = vmatpush1.msra.mxu0 0.0
        %318 = vmatprep.subr.mxu0 0.0
        %319 = vmatpush1.msra.mxu0 0.0
        %320 = vmatprep.subr.mxu0 0.0
        %321 = vmatpush1.msra.mxu0 0.0
        %322 = vmatprep.subr.mxu0 0.0
        %323 = vmatpush1.msra.mxu0 0.0
        %324 = vmatprep.subr.mxu0 0.0
        %325 = vmatpush1.msra.mxu0 0.0
        %326 = vmatprep.subr.mxu0 0.0
        %327 = vmatpush1.msra.mxu0 0.0
        %328 = vmatprep.subr.mxu0 0.0
        %329 = vmatpush1.msra.mxu0 0.0
        %330 = vmatprep.subr.mxu0 0.0
        %331 = vmatpush1.msra.mxu0 0.0
        %332 = vmatprep.subr.mxu0 0.0
        %333 = vmatpush1.msra.mxu0 0.0
        %334 = vmatprep.subr.mxu0 0.0
        %335 = vmatpush1.msra.mxu0 0.0
        %336 = vmatprep.subr.mxu0 0.0
        %337 = vmatpush1.msra.mxu0 0.0
        %338 = vmatprep.subr.mxu0 0.0
        %339 = vmatpush1.msra.mxu0 0.0
        %340 = vmatprep.subr.mxu0 0.0
        %341 = vmatpush1.msra.mxu0 0.0
        %342 = vmatprep.subr.mxu0 0.0
        %343 = vmatpush1.msra.mxu0 0.0
        %344 = vmatprep.subr.mxu0 0.0
        %345 = vmatpush1.msra.mxu0 0.0
        %346 = vmatprep.subr.mxu0 0.0
        %347 = vmatpush1.msra.mxu0 0.0
        %348 = vmatprep.subr.mxu0 0.0
        %349 = vmatpush1.msra.mxu0 0.0
        %350 = vmatprep.subr.mxu0 0.0
        %351 = vmatpush1.msra.mxu0 0.0
        %352 = vmatprep.subr.mxu0 0.0
        %353 = vmatpush1.msra.mxu0 0.0
        %354 = vmatprep.subr.mxu0 0.0
        %355 = vmatpush1.msra.mxu0 0.0
        %356 = vmatprep.mubr.f32.mxu0 0.0
        %357 = vmatmul.mubr.f32.gmra.mrb[0].mxu0 %v290
        %v358 = vpop.f32.mrb[0].mxu0
        %v359 = vadd.f32 0.0, %v358
        %v360 = vpop.f32.mrb[0].mxu0
        %361 = vdwg.mxu0
        %v362 = vmul.f32 %v359, 2.0
        %363 = vst [vmem:[%s196] sm:$0xff] %v362
        %s364 = sand.u32 %s114, 1
        %s365 = scalar_lea.sflag [#allocation3], %s364
        %s366 = sand.u32 %s114, 1
        %s367 = smul.addr %s366, 8
        %s368 = scalar_lea.vmem [#allocation2], %s367
        // Predicated region
        $region33: #{tpu_custom_call.1} parent=31 // pred_check
          %p369 = pneg %p124
        $region34: #{tpu_custom_call.1} parent=31 // pred_check_branch
          %371 = sbr.rel (%p369) target = $region36
        $region35: #{tpu_custom_call.1} parent=31 // pred_region
          %s373 = ssub.s32 128, 128
          %374 = vsyncadd %s365, %s373
          %s375 = sadd.s32 %s22, %s21
          %s376 = smul.addr %s375, 128
          %s377 = scalar_lea.hbm %s3, %s376
          %s379 = sshll.u32 %s368, 4
          %s380 = int_to_ptr.vmem [resolvable:$true] %s379
          %382 = dma.vmem_to_hbm [thread:$0]  %s380, 128, %s377, %s365
        $region36: #{tpu_custom_call.1} parent=31 // pred_fallthru
          _
      $region32: #{tpu_custom_call.1} parent=5 // pred_fallthru
        _
      %p383 = scmp.le.s32.totalorder 2, %s12
      // Predicated region
      $region37: #{tpu_custom_call.1} parent=5 // pred_check
        %p384 = pneg %p383
      $region38: #{tpu_custom_call.1} parent=5 // pred_check_branch
        %386 = sbr.rel (%p384) target = $region40
      $region39: #{tpu_custom_call.1} parent=5 // pred_region
        %s387 = ssub.s32 %s12, 2
        // Predicated region
        $region41: #{tpu_custom_call.1} parent=39 // pred_check
          %p388 = pneg %p130
        $region42: #{tpu_custom_call.1} parent=39 // pred_check_branch
          %390 = sbr.rel (%p388) target = $region44
        $region43: #{tpu_custom_call.1} parent=39 // pred_region
          %s391 = sand.u32 %s115, 1
          %s392 = scalar_lea.sflag [#allocation3], %s391
          %s393 = sand.u32 %s115, 1
          %s394 = smul.addr %s393, 8
          %s395 = scalar_lea.vmem [#allocation2], %s394
          %396 = dma.done %s392, 128
        $region44: #{tpu_custom_call.1} parent=39 // pred_fallthru
          _
      $region40: #{tpu_custom_call.1} parent=5 // pred_fallthru
        _
    $region6: #{tpu_custom_call.1} parent=1 // loop_footer
      %s16 = sadd.s32 1, %s12
    $region7: #{tpu_custom_call.1} parent=1 // loop_footer_branch
      %11 = sbr.rel target = $region3
    $region8: #{tpu_custom_call.1} parent=1 // loop_exit
      _
    %397 = vsyncpa [#allocation3], 1
    %s398 = scalar_lea.sflag [#allocation3], 1
    %399 = vsyncpa %s398, 1

</llo_original>
